<compile_context>
chip_gen: v7x
topology: tpu7x:2x2x1
jax: 0.10.0
libtpu: 0.0.40
codegen_flags: <defaults>
</compile_context>

<pallas_src>
import math

import jax
import jax.numpy as jnp
import numpy as np
from jax.experimental import pallas as pl
from jax.experimental.pallas import tpu as pltpu


_MAX_ROW_TILE = 2048  # rows per pipelined grid step (VMEM-safe on v5e/v6e/v7x)


# ----------------------------------------------------------------------------
# Kernel: fused hyper-network + generated linear
# ----------------------------------------------------------------------------
def random_linear_kernel(x_ref, wz_ref, bz_ref, ww_ref, bw_ref, wb_ref, bb_ref,
                         o_ref, w_sc, b_sc):
    # x_ref : [tm, I] (native dtype)     wz_ref / bz_ref : [1, D] f32
    # ww_ref: [D, I*O]  (i-major, o-minor; pre-permuted at param-load time)
    # bw_ref: [1, I*O]   wb_ref: [D, O]   bb_ref: [1, O]
    # o_ref : [tm, O] (native dtype)
    # w_sc  : [I, O] f32 VMEM scratch     b_sc: [1, O] f32 VMEM scratch
    I = x_ref.shape[1]
    O = o_ref.shape[1]

    # Hyper-network: run once per core (first inner grid step), persist in VMEM scratch.
    @pl.when(pl.program_id(1) == 0)
    def _():
        w_flat = jnp.dot(wz_ref[...], ww_ref[...],
                         preferred_element_type=jnp.float32) + bw_ref[...]      # [1, I*O]
        w_sc[...] = w_flat.reshape(I, O)                                         # [I, O]
        b_sc[...] = jnp.dot(bz_ref[...], wb_ref[...],
                            preferred_element_type=jnp.float32) + bb_ref[...]    # [1, O]

    # Main matmul in x's native dtype (bf16 is MXU-native on all gens), f32 accumulate,
    # f32 bias add, cast only at the lane-dense [tm, O] store.
    w_io = w_sc[...].astype(x_ref.dtype)
    y = jnp.dot(x_ref[...], w_io, preferred_element_type=jnp.float32)            # [tm, O]
    o_ref[...] = (y + b_sc[...]).astype(o_ref.dtype)


# ----------------------------------------------------------------------------
# One-time parameter preparation (do this at parameter-load time, not per forward)
# ----------------------------------------------------------------------------
def prepare_random_linear_params(params, meta_dim, in_feature_dim, out_feature_dim):
    """Pre-permute torch nn.Linear layouts so the hyper-net output lands in [I, O].

    params:  w_w [O*I, D], w_b [O*I]   (w_linear)
             b_w [O, D],   b_b [O]     (b_linear)
    Returns: ww_k [D, I*O], bw_k [1, I*O], wb_k [D, O], bb_k [1, O]  (all f32)
      with   ww_k[d, i*O + o] = w_w[o*I + i, d],  bw_k[0, i*O + o] = w_b[o*I + i]
    """
    D, I, O = meta_dim, in_feature_dim, out_feature_dim
    ww_k = jnp.transpose(params['w_w'].reshape(O, I, D), (2, 1, 0)).reshape(D, I * O)
    bw_k = params['w_b'].reshape(O, I).T.reshape(1, I * O)
    wb_k = params['b_w'].T                           # [D, O]
    bb_k = params['b_b'].reshape(1, O)
    prepared = dict(ww_k=ww_k.astype(jnp.float32), bw_k=bw_k.astype(jnp.float32),
                    wb_k=wb_k.astype(jnp.float32), bb_k=bb_k.astype(jnp.float32))
    return jax.block_until_ready(prepared)


def _round_up(a, b):
    return ((a + b - 1) // b) * b


# ----------------------------------------------------------------------------
# Wrapper
# ----------------------------------------------------------------------------
def random_linear(x, w_z, b_z, prepared, *, row_tile=None, core_splits=1):
    """Pallas RandomLinear forward.

    x          : [N, *, in_feature]  (kept in its native dtype; output matches it)
    prepared   : output of prepare_random_linear_params()
    row_tile   : optional rows per grid step (auto: <=2048, sublane-aligned)
    core_splits: set to 2 on v7x (2 TensorCores) for large M; auto-disabled when M small.
    """
    ww_k, bw_k, wb_k, bb_k = (prepared[k] for k in ('ww_k', 'bw_k', 'wb_k', 'bb_k'))
    D = ww_k.shape[0]
    I = x.shape[-1]
    O = bb_k.shape[-1]

    lead = x.shape[:-1]
    M = int(np.prod(lead)) if lead else 1
    x2 = x.reshape(M, I)                              # native dtype, no f32 upcast
    out_dtype = x.dtype

    wz2 = w_z.reshape(1, D).astype(jnp.float32)
    bz2 = b_z.reshape(1, D).astype(jnp.float32)

    # Sublane alignment of the row tile: 8 for 32-bit dtypes, 16 for 16-bit (bf16).
    sub = 8 if jnp.dtype(out_dtype).itemsize >= 4 else 16

    # Only split across cores when each core gets enough rows to amortize the split.
    if M < core_splits * 1024:
        core_splits = 1

    if row_tile is None:
        n_blocks = max(1, -(-M // _MAX_ROW_TILE))     # cdiv
        n_blocks = _round_up(n_blocks, core_splits)
        row_tile = _round_up(-(-M // n_blocks), sub)
    else:
        row_tile = _round_up(row_tile, sub)
        n_blocks = _round_up(max(1, -(-M // row_tile)), core_splits)

    Mp = n_blocks * row_tile
    if Mp != M:
        x2 = jnp.pad(x2, ((0, Mp - M), (0, 0)))
    steps = n_blocks // core_splits                   # inner ("arbitrary") grid extent

    grid = (core_splits, steps)
    rep = lambda a: pl.BlockSpec(a.shape, lambda c, s: (0, 0))   # replicated full block

    out2 = pl.pallas_call(
        random_linear_kernel,
        out_shape=jax.ShapeDtypeStruct((Mp, O), out_dtype),
        grid=grid,
        in_specs=[
            pl.BlockSpec((row_tile, I), lambda c, s: (c * steps + s, 0)),
            rep(wz2), rep(bz2), rep(ww_k), rep(bw_k), rep(wb_k), rep(bb_k),
        ],
        out_specs=pl.BlockSpec((row_tile, O), lambda c, s: (c * steps + s, 0)),
        scratch_shapes=[pltpu.VMEM((I, O), jnp.float32),
                        pltpu.VMEM((1, O), jnp.float32)],
        compiler_params=pltpu.CompilerParams(
            dimension_semantics=("parallel", "arbitrary")),
    )(x2, wz2, bz2, ww_k, bw_k, wb_k, bb_k)

    if Mp != M:
        out2 = out2[:M]
    return out2.reshape(*lead, O)


# ----------------------------------------------------------------------------
# Deterministic init (mirrors torch nn.Linear default init)
# ----------------------------------------------------------------------------
def init_linear(key, in_f, out_f):
    kw, kb = jax.random.split(key)
    bound = 1.0 / math.sqrt(in_f)
    w = jax.random.uniform(kw, (out_f, in_f), jnp.float32, -bound, bound)
    b = jax.random.uniform(kb, (out_f,), jnp.float32, -bound, bound)
    return w, b


# ----------------------------------------------------------------------------
# Float64 numpy reference (mirrors the PyTorch forward exactly)
# ----------------------------------------------------------------------------
def ref_random_linear_np(x_np64, w_z, b_z, params):
    wz = np.asarray(w_z, np.float64)
    bz = np.asarray(b_z, np.float64)
    ww = np.asarray(params['w_w'], np.float64)
    wb_ = np.asarray(params['w_b'], np.float64)
    bw = np.asarray(params['b_w'], np.float64)
    bb_ = np.asarray(params['b_b'], np.float64)
    O = bw.shape[0]
    I = x_np64.shape[-1]
    w_kernel = (wz @ ww.T + wb_).reshape(O, I)        # [O, I]
    b_kernel = bz @ bw.T + bb_                        # [O]
    return x_np64 @ w_kernel.T + b_kernel


def _rel_err(out_jax, ref64):
    out64 = np.asarray(out_jax.astype(jnp.float32), np.float64)
    return np.max(np.abs(out64 - ref64)) / (np.max(np.abs(ref64)) + 1e-12)


# ----------------------------------------------------------------------------
if __name__ == "__main__":
    meta_dim, in_feature_dim, out_feature_dim = 32, 16, 128

    root = jax.random.PRNGKey(0)
    k_x, k_wz, k_bz, k_w, k_b, k_xb = jax.random.split(root, 6)

    w_z = jax.random.normal(k_wz, (meta_dim,), jnp.float32)
    b_z = jax.random.normal(k_bz, (meta_dim,), jnp.float32)
    w_w, w_b = init_linear(k_w, meta_dim, out_feature_dim * in_feature_dim)
    b_w, b_b = init_linear(k_b, meta_dim, out_feature_dim)
    params = dict(w_w=w_w, w_b=w_b, b_w=b_w, b_b=b_b)

    # One-time parameter preparation (parameter-load time).
    prepared = prepare_random_linear_params(params, meta_dim, in_feature_dim,
                                            out_feature_dim)

    # ---- Run 1: small f32 x (demo shape, single-step grid) -------------------
    x_shape = (2, 4, 16, in_feature_dim)              # [N, *, in_feature], M = 128
    x = jax.random.normal(k_x, x_shape, jnp.float32)

    out = random_linear(x, w_z, b_z, prepared)
    out = jax.block_until_ready(out)
    assert out.shape == x_shape[:-1] + (out_feature_dim,)
    assert out.dtype == x.dtype

    ref = ref_random_linear_np(np.asarray(x, np.float64), w_z, b_z, params)
    err = _rel_err(out, ref)
    assert err < 1e-2, f"f32 path: max relative error too large: {err}"

    # ---- Run 2: bf16 x at larger M (exercises the multi-step pipelined grid) -
    xb_shape = (8, 512, in_feature_dim)               # M = 4096 -> 2 row tiles of 2048
    xb = jax.random.normal(k_xb, xb_shape, jnp.float32).astype(jnp.bfloat16)

    out_b = random_linear(xb, w_z, b_z, prepared)     # core_splits=2 on v7x at large M
    out_b = jax.block_until_ready(out_b)
    assert out_b.shape == xb_shape[:-1] + (out_feature_dim,)
    assert out_b.dtype == jnp.bfloat16

    xb64 = np.asarray(xb.astype(jnp.float32), np.float64)
    ref_b = ref_random_linear_np(xb64, w_z, b_z, params)
    err_b = _rel_err(out_b, ref_b)
    assert err_b < 5e-2, f"bf16 path: max relative error too large: {err_b}"

    print("KERNEL_OK")
</pallas_src>

<mosaic_0001>
module attributes {stable_mosaic.version = 11 : i64} {
  func.func @random_linear_kernel(%arg0: i32, %arg1: i32, %arg2: memref<128x16xf32, #tpu.memory_space<vmem>>, %arg3: memref<1x32xf32, #tpu.memory_space<vmem>>, %arg4: memref<1x32xf32, #tpu.memory_space<vmem>>, %arg5: memref<32x2048xf32, #tpu.memory_space<vmem>>, %arg6: memref<1x2048xf32, #tpu.memory_space<vmem>>, %arg7: memref<32x128xf32, #tpu.memory_space<vmem>>, %arg8: memref<1x128xf32, #tpu.memory_space<vmem>>, %arg9: memref<128x128xf32, #tpu.memory_space<vmem>>, %arg10: memref<16x128xf32, #tpu.memory_space<vmem>>, %arg11: memref<1x128xf32, #tpu.memory_space<vmem>>) attributes {dimension_semantics = [#tpu.dimension_semantics<parallel>, #tpu.dimension_semantics<arbitrary>], iteration_bounds = array<i64: 1, 1>, scalar_prefetch = 0 : i64, scratch_operands = 2 : i64, tpu.core_type = #tpu.core_type<tc>, window_params = [{transform_indices = @transform_0, window_bounds = array<i64: 128, 16>}, {pipeline_mode = #tpu.pipeline_mode<synchronous>, transform_indices = @transform_1, window_bounds = array<i64: 1, 32>}, {pipeline_mode = #tpu.pipeline_mode<synchronous>, transform_indices = @transform_2, window_bounds = array<i64: 1, 32>}, {pipeline_mode = #tpu.pipeline_mode<synchronous>, transform_indices = @transform_3, window_bounds = array<i64: 32, 2048>}, {pipeline_mode = #tpu.pipeline_mode<synchronous>, transform_indices = @transform_4, window_bounds = array<i64: 1, 2048>}, {pipeline_mode = #tpu.pipeline_mode<synchronous>, transform_indices = @transform_5, window_bounds = array<i64: 32, 128>}, {pipeline_mode = #tpu.pipeline_mode<synchronous>, transform_indices = @transform_6, window_bounds = array<i64: 1, 128>}, {transform_indices = @transform_7, window_bounds = array<i64: 128, 128>}]} {
    %c0_i32 = arith.constant 0 : i32
    %0 = arith.cmpi eq, %arg1, %c0_i32 : i32
    %1 = arith.extui %0 : i1 to i32
    %c0_i32_0 = arith.constant 0 : i32
    %2 = arith.cmpi ne, %1, %c0_i32_0 : i32
    scf.if %2 {
      %c0_8 = arith.constant 0 : index
      %c0_9 = arith.constant 0 : index
      %10 = vector.load %arg3[%c0_8, %c0_9] : memref<1x32xf32, #tpu.memory_space<vmem>>, vector<1x32xf32>
      %c0_10 = arith.constant 0 : index
      %c0_11 = arith.constant 0 : index
      %11 = vector.load %arg5[%c0_10, %c0_11] : memref<32x2048xf32, #tpu.memory_space<vmem>>, vector<32x2048xf32>
      %cst_12 = arith.constant dense<0.000000e+00> : vector<1x2048xf32>
      %12 = tpu.matmul %10, %11, %cst_12 {dimension_numbers = #tpu.dot_dimension_numbers<[1], [0], [0], [1], [0, 0, 1, 1], [], []>} : vector<1x32xf32>, vector<32x2048xf32>, vector<1x2048xf32> -> vector<1x2048xf32>
      %c0_13 = arith.constant 0 : index
      %c0_14 = arith.constant 0 : index
      %13 = vector.load %arg6[%c0_13, %c0_14] : memref<1x2048xf32, #tpu.memory_space<vmem>>, vector<1x2048xf32>
      %14 = arith.addf %12, %13 : vector<1x2048xf32>
      %15 = vector.shape_cast %14 : vector<1x2048xf32> to vector<16x128xf32>
      %c0_15 = arith.constant 0 : index
      %c0_16 = arith.constant 0 : index
      %16 = vector.load %arg10[%c0_15, %c0_16] : memref<16x128xf32, #tpu.memory_space<vmem>>, vector<16x128xf32>
      tpu.vector_store %arg10[%c0_15, %c0_16], %15 {strides = array<i32>} : memref<16x128xf32, #tpu.memory_space<vmem>>, vector<16x128xf32>,
      %c0_17 = arith.constant 0 : index
      %c0_18 = arith.constant 0 : index
      %17 = vector.load %arg4[%c0_17, %c0_18] : memref<1x32xf32, #tpu.memory_space<vmem>>, vector<1x32xf32>
      %c0_19 = arith.constant 0 : index
      %c0_20 = arith.constant 0 : index
      %18 = vector.load %arg7[%c0_19, %c0_20] : memref<32x128xf32, #tpu.memory_space<vmem>>, vector<32x128xf32>
      %cst_21 = arith.constant dense<0.000000e+00> : vector<1x128xf32>
      %19 = tpu.matmul %17, %18, %cst_21 {dimension_numbers = #tpu.dot_dimension_numbers<[1], [0], [0], [1], [0, 0, 1, 1], [], []>} : vector<1x32xf32>, vector<32x128xf32>, vector<1x128xf32> -> vector<1x128xf32>
      %c0_22 = arith.constant 0 : index
      %c0_23 = arith.constant 0 : index
      %20 = vector.load %arg8[%c0_22, %c0_23] : memref<1x128xf32, #tpu.memory_space<vmem>>, vector<1x128xf32>
      %21 = arith.addf %19, %20 : vector<1x128xf32>
      %c0_24 = arith.constant 0 : index
      %c0_25 = arith.constant 0 : index
      %22 = vector.load %arg11[%c0_24, %c0_25] : memref<1x128xf32, #tpu.memory_space<vmem>>, vector<1x128xf32>
      tpu.vector_store %arg11[%c0_24, %c0_25], %21 {strides = array<i32>} : memref<1x128xf32, #tpu.memory_space<vmem>>, vector<1x128xf32>,
    } else {
    }
    %c0 = arith.constant 0 : index
    %c0_1 = arith.constant 0 : index
    %3 = vector.load %arg10[%c0, %c0_1] : memref<16x128xf32, #tpu.memory_space<vmem>>, vector<16x128xf32>
    %c0_2 = arith.constant 0 : index
    %c0_3 = arith.constant 0 : index
    %4 = vector.load %arg2[%c0_2, %c0_3] : memref<128x16xf32, #tpu.memory_space<vmem>>, vector<128x16xf32>
    %cst = arith.constant dense<0.000000e+00> : vector<128x128xf32>
    %5 = tpu.matmul %4, %3, %cst {dimension_numbers = #tpu.dot_dimension_numbers<[1], [0], [0], [1], [0, 0, 1, 1], [], []>} : vector<128x16xf32>, vector<16x128xf32>, vector<128x128xf32> -> vector<128x128xf32>
    %c0_4 = arith.constant 0 : index
    %c0_5 = arith.constant 0 : index
    %6 = vector.load %arg11[%c0_4, %c0_5] : memref<1x128xf32, #tpu.memory_space<vmem>>, vector<1x128xf32>
    %7 = vector.broadcast %6 : vector<1x128xf32> to vector<128x128xf32>
    %8 = arith.addf %5, %7 : vector<128x128xf32>
    %c0_6 = arith.constant 0 : index
    %c0_7 = arith.constant 0 : index
    %9 = vector.load %arg9[%c0_6, %c0_7] : memref<128x128xf32, #tpu.memory_space<vmem>>, vector<128x128xf32>
    tpu.vector_store %arg9[%c0_6, %c0_7], %8 {strides = array<i32>} : memref<128x128xf32, #tpu.memory_space<vmem>>, vector<128x128xf32>,
    return
  }
  func.func @transform_0(%arg0: i32, %arg1: i32) -> (i32, i32) {
    %c1_i32 = arith.constant 1 : i32
    %0 = arith.muli %arg0, %c1_i32 : i32
    %1 = arith.addi %0, %arg1 : i32
    %c0_i32 = arith.constant 0 : i32
    %c0_i32_0 = arith.constant 0 : i32
    return %1, %c0_i32 : i32, i32
  }
  func.func @transform_1(%arg0: i32, %arg1: i32) -> (i32, i32) {
    %c0_i32 = arith.constant 0 : i32
    %c0_i32_0 = arith.constant 0 : i32
    %c0_i32_1 = arith.constant 0 : i32
    return %c0_i32, %c0_i32_0 : i32, i32
  }
  func.func @transform_2(%arg0: i32, %arg1: i32) -> (i32, i32) {
    %c0_i32 = arith.constant 0 : i32
    %c0_i32_0 = arith.constant 0 : i32
    %c0_i32_1 = arith.constant 0 : i32
    return %c0_i32, %c0_i32_0 : i32, i32
  }
  func.func @transform_3(%arg0: i32, %arg1: i32) -> (i32, i32) {
    %c0_i32 = arith.constant 0 : i32
    %c0_i32_0 = arith.constant 0 : i32
    %c0_i32_1 = arith.constant 0 : i32
    return %c0_i32, %c0_i32_0 : i32, i32
  }
  func.func @transform_4(%arg0: i32, %arg1: i32) -> (i32, i32) {
    %c0_i32 = arith.constant 0 : i32
    %c0_i32_0 = arith.constant 0 : i32
    %c0_i32_1 = arith.constant 0 : i32
    return %c0_i32, %c0_i32_0 : i32, i32
  }
  func.func @transform_5(%arg0: i32, %arg1: i32) -> (i32, i32) {
    %c0_i32 = arith.constant 0 : i32
    %c0_i32_0 = arith.constant 0 : i32
    %c0_i32_1 = arith.constant 0 : i32
    return %c0_i32, %c0_i32_0 : i32, i32
  }
  func.func @transform_6(%arg0: i32, %arg1: i32) -> (i32, i32) {
    %c0_i32 = arith.constant 0 : i32
    %c0_i32_0 = arith.constant 0 : i32
    %c0_i32_1 = arith.constant 0 : i32
    return %c0_i32, %c0_i32_0 : i32, i32
  }
  func.func @transform_7(%arg0: i32, %arg1: i32) -> (i32, i32) {
    %c1_i32 = arith.constant 1 : i32
    %0 = arith.muli %arg0, %c1_i32 : i32
    %1 = arith.addi %0, %arg1 : i32
    %c0_i32 = arith.constant 0 : i32
    %c0_i32_0 = arith.constant 0 : i32
    return %1, %c0_i32 : i32, i32
  }
}

</mosaic_0001>

<llo_original>
// kernel: tpu_custom_call.1
$region0: #{tpu_custom_call.1}
  #allocation0 [shape = 'u32[]', space=smem, size = 0x4, offset = 0x4, fixed_abs, tag = 'smem constant byte address 0x4 - core index']
  #allocation1 [shape = 'u32[144,128]{1,0:T(1,128)}', space=vmem, size = 0x12000, scoped, tag = 'internal scratch']
  #allocation2 [shape = 'f32[16,128]{1,0:T(8,128)}', space=vmem, size = 0x2000, scoped, tag = 'scratch operand']
  #allocation3 [shape = 'f32[1,128]{1,0:T(1,128)}', space=vmem, size = 0x200, scoped, tag = 'scratch operand']
  %s0 = inlined_call_operand.vmem [shape: f32[128,16], index: 0, kind: input, shape index: {}]
  %s1 = inlined_call_operand.vmem [shape: f32[1,32], index: 1, kind: input, shape index: {}]
  %s2 = inlined_call_operand.vmem [shape: f32[1,32], index: 2, kind: input, shape index: {}]
  %s3 = inlined_call_operand.hbm [shape: f32[32,2048], index: 3, kind: input, shape index: {}]
  %s4 = inlined_call_operand.vmem [shape: f32[1,2048], index: 4, kind: input, shape index: {}]
  %s5 = inlined_call_operand.vmem [shape: f32[32,128], index: 5, kind: input, shape index: {}]
  %s6 = inlined_call_operand.vmem [shape: f32[1,128], index: 6, kind: input, shape index: {}]
  %s7 = inlined_call_operand.hbm [shape: f32[128,128], index: 7, kind: output, shape index: {}]
  %s8 = sld [smem:[#allocation0]]
  $region46: #{tpu_custom_call.1} parent=0
    _
  %s10 = ssub.s32 1, %s8
  %s11 = scalar_select 0, %s10, %s8
  $region1: #{tpu_custom_call.1} parent=0
    #allocation4 [shape = 'u8[262144]{0}', space=vmem, size = 0x40000, scoped, tag = 'input window, operand 3, single buffered']
    #allocation5 [shape = 's32[1]{0}', space=sflag, size = 0x4, scoped, tag = 'scoped memory for tpu_custom_call.1']
    #allocation6 [shape = 's32[1]{0}', space=sflag, size = 0x4, scoped, tag = 'scoped memory for tpu_custom_call.1']
    #allocation7 [shape = 'u8[65536]{0}', space=vmem, size = 0x10000, scoped, tag = 'output window, operand 0, single buffered']
    %12 = vsyncpa [#allocation5], 0
    %13 = vsyncpa [#allocation6], 0
    // Predicated region
    $region2: #{tpu_custom_call.1} parent=1 // pred_check
      _
    $region3: #{tpu_custom_call.1} parent=1 // pred_check_branch
      %15 = sbr.rel (0) target = $region5
    $region4: #{tpu_custom_call.1} parent=1 // pred_region
      %s16 = sadd.s32 0, 0
      %s17 = smul.u32 16, %s16
      %p18 = scmp.lt.s32.totalorder %s17, 15
      %s19 = scalar_select %p18, %s17, 15
      %s20 = smul.addr %s19, 8
      %s21 = scalar_lea.vmem %s0, %s20
      %s22 = sadd.s32 0, 0
      %s23 = smul.u32 16, %s22
    $region5: #{tpu_custom_call.1} parent=1 // pred_fallthru
      _
    // Predicated region
    $region6: #{tpu_custom_call.1} parent=1 // pred_check
      _
    $region7: #{tpu_custom_call.1} parent=1 // pred_check_branch
      %25 = sbr.rel (0) target = $region9
    $region8: #{tpu_custom_call.1} parent=1 // pred_region
      _
    $region9: #{tpu_custom_call.1} parent=1 // pred_fallthru
      _
    // Predicated region
    $region10: #{tpu_custom_call.1} parent=1 // pred_check
      _
    $region11: #{tpu_custom_call.1} parent=1 // pred_check_branch
      %27 = sbr.rel (0) target = $region13
    $region12: #{tpu_custom_call.1} parent=1 // pred_region
      _
    $region13: #{tpu_custom_call.1} parent=1 // pred_fallthru
      _
    // Predicated region
    $region14: #{tpu_custom_call.1} parent=1 // pred_check
      _
    $region15: #{tpu_custom_call.1} parent=1 // pred_check_branch
      %29 = sbr.rel (0) target = $region17
    $region16: #{tpu_custom_call.1} parent=1 // pred_region
      %s31 = ssub.s32 8192, 8192
      %32 = vsyncadd [#allocation5], %s31
      %s33 = sshll.u32 [#allocation4], 4
      %s34 = int_to_ptr.vmem [resolvable:$true] %s33
      %39 = dma.hbm_to_vmem [thread:$0]  %s3, 8192, %s34, [#allocation5], 2048, 2048, 128
    $region17: #{tpu_custom_call.1} parent=1 // pred_fallthru
      _
    // Predicated region
    $region18: #{tpu_custom_call.1} parent=1 // pred_check
      _
    $region19: #{tpu_custom_call.1} parent=1 // pred_check_branch
      %41 = sbr.rel (0) target = $region21
    $region20: #{tpu_custom_call.1} parent=1 // pred_region
      _
    $region21: #{tpu_custom_call.1} parent=1 // pred_fallthru
      _
    // Predicated region
    $region22: #{tpu_custom_call.1} parent=1 // pred_check
      _
    $region23: #{tpu_custom_call.1} parent=1 // pred_check_branch
      %43 = sbr.rel (0) target = $region25
    $region24: #{tpu_custom_call.1} parent=1 // pred_region
      _
    $region25: #{tpu_custom_call.1} parent=1 // pred_fallthru
      _
    // Predicated region
    $region26: #{tpu_custom_call.1} parent=1 // pred_check
      _
    $region27: #{tpu_custom_call.1} parent=1 // pred_check_branch
      %45 = sbr.rel (0) target = $region29
    $region28: #{tpu_custom_call.1} parent=1 // pred_region
      _
    $region29: #{tpu_custom_call.1} parent=1 // pred_fallthru
      _
    // Predicated region
    $region30: #{tpu_custom_call.1} parent=1 // pred_check
      _
    $region31: #{tpu_custom_call.1} parent=1 // pred_check_branch
      %47 = sbr.rel (0) target = $region33
    $region32: #{tpu_custom_call.1} parent=1 // pred_region
      %48 = dma.done [#allocation5], 8192
    $region33: #{tpu_custom_call.1} parent=1 // pred_fallthru
      _
    %s49 = sadd.s32 0, 0
    %s50 = smul.u32 16, %s49
    %p51 = scmp.lt.s32.totalorder %s50, 15
    %s52 = scalar_select %p51, %s50, 15
    %s53 = smul.addr %s52, 8
    %s54 = scalar_lea.vmem %s0, %s53
    %s55 = sadd.s32 0, 0
    %s56 = smul.u32 16, %s55
    %p57 = scmp.lt.s32.totalorder %s56, 15
    %s58 = scalar_select %p57, %s56, 15
    %s59 = smul.addr %s58, 8
    %s60 = scalar_lea.vmem %s0, %s59
    %s61 = sadd.s32 0, 0
    %s62 = smul.u32 16, %s61
    %s63 = sadd.s32 0, 0
    %s64 = smul.u32 16, %s63
    %p65 = scmp.eq.s32.totalorder 0, 0
    // Predicated region
    $region34: #{tpu_custom_call.1} parent=1 // pred_check
      %p66 = pneg %p65
    $region35: #{tpu_custom_call.1} parent=1 // pred_check_branch
      %68 = sbr.rel (%p66) target = $region37
    $region36: #{tpu_custom_call.1} parent=1 // pred_region
      %v69 = vld [vmem:[%s1] sm:$0x1]
      %v70 = vld [vmem:[#allocation4] sm:$0xff]
      %v71 = vld [vmem:[#allocation4 + $0x8] sm:$0xff]
      %v72 = vld [vmem:[#allocation4 + $0x10] sm:$0xff]
      %v73 = vld [vmem:[#allocation4 + $0x18] sm:$0xff]
      %v74 = vld [vmem:[#allocation4 + $0x20] sm:$0xff]
      %v75 = vld [vmem:[#allocation4 + $0x28] sm:$0xff]
      %v76 = vld [vmem:[#allocation4 + $0x30] sm:$0xff]
      %v77 = vld [vmem:[#allocation4 + $0x38] sm:$0xff]
      %v78 = vld [vmem:[#allocation4 + $0x40] sm:$0xff]
      %v79 = vld [vmem:[#allocation4 + $0x48] sm:$0xff]
      %v80 = vld [vmem:[#allocation4 + $0x50] sm:$0xff]
      %v81 = vld [vmem:[#allocation4 + $0x58] sm:$0xff]
      %v82 = vld [vmem:[#allocation4 + $0x60] sm:$0xff]
      %v83 = vld [vmem:[#allocation4 + $0x68] sm:$0xff]
      %v84 = vld [vmem:[#allocation4 + $0x70] sm:$0xff]
      %v85 = vld [vmem:[#allocation4 + $0x78] sm:$0xff]
      %v86 = vld [vmem:[#allocation4 + $0x80] sm:$0xff]
      %v87 = vld [vmem:[#allocation4 + $0x88] sm:$0xff]
      %v88 = vld [vmem:[#allocation4 + $0x90] sm:$0xff]
      %v89 = vld [vmem:[#allocation4 + $0x98] sm:$0xff]
      %v90 = vld [vmem:[#allocation4 + $0xa0] sm:$0xff]
      %v91 = vld [vmem:[#allocation4 + $0xa8] sm:$0xff]
      %v92 = vld [vmem:[#allocation4 + $0xb0] sm:$0xff]
      %v93 = vld [vmem:[#allocation4 + $0xb8] sm:$0xff]
      %v94 = vld [vmem:[#allocation4 + $0xc0] sm:$0xff]
      %v95 = vld [vmem:[#allocation4 + $0xc8] sm:$0xff]
      %v96 = vld [vmem:[#allocation4 + $0xd0] sm:$0xff]
      %v97 = vld [vmem:[#allocation4 + $0xd8] sm:$0xff]
      %v98 = vld [vmem:[#allocation4 + $0xe0] sm:$0xff]
      %v99 = vld [vmem:[#allocation4 + $0xe8] sm:$0xff]
      %v100 = vld [vmem:[#allocation4 + $0xf0] sm:$0xff]
      %v101 = vld [vmem:[#allocation4 + $0xf8] sm:$0xff]
      %v102 = vld [vmem:[#allocation4 + $0x100] sm:$0xff]
      %v103 = vld [vmem:[#allocation4 + $0x108] sm:$0xff]
      %v104 = vld [vmem:[#allocation4 + $0x110] sm:$0xff]
      %v105 = vld [vmem:[#allocation4 + $0x118] sm:$0xff]
      %v106 = vld [vmem:[#allocation4 + $0x120] sm:$0xff]
      %v107 = vld [vmem:[#allocation4 + $0x128] sm:$0xff]
      %v108 = vld [vmem:[#allocation4 + $0x130] sm:$0xff]
      %v109 = vld [vmem:[#allocation4 + $0x138] sm:$0xff]
      %v110 = vld [vmem:[#allocation4 + $0x140] sm:$0xff]
      %v111 = vld [vmem:[#allocation4 + $0x148] sm:$0xff]
      %v112 = vld [vmem:[#allocation4 + $0x150] sm:$0xff]
      %v113 = vld [vmem:[#allocation4 + $0x158] sm:$0xff]
      %v114 = vld [vmem:[#allocation4 + $0x160] sm:$0xff]
      %v115 = vld [vmem:[#allocation4 + $0x168] sm:$0xff]
      %v116 = vld [vmem:[#allocation4 + $0x170] sm:$0xff]
      %v117 = vld [vmem:[#allocation4 + $0x178] sm:$0xff]
      %v118 = vld [vmem:[#allocation4 + $0x180] sm:$0xff]
      %v119 = vld [vmem:[#allocation4 + $0x188] sm:$0xff]
      %v120 = vld [vmem:[#allocation4 + $0x190] sm:$0xff]
      %v121 = vld [vmem:[#allocation4 + $0x198] sm:$0xff]
      %v122 = vld [vmem:[#allocation4 + $0x1a0] sm:$0xff]
      %v123 = vld [vmem:[#allocation4 + $0x1a8] sm:$0xff]
      %v124 = vld [vmem:[#allocation4 + $0x1b0] sm:$0xff]
      %v125 = vld [vmem:[#allocation4 + $0x1b8] sm:$0xff]
      %v126 = vld [vmem:[#allocation4 + $0x1c0] sm:$0xff]
      %v127 = vld [vmem:[#allocation4 + $0x1c8] sm:$0xff]
      %v128 = vld [vmem:[#allocation4 + $0x1d0] sm:$0xff]
      %v129 = vld [vmem:[#allocation4 + $0x1d8] sm:$0xff]
      %v130 = vld [vmem:[#allocation4 + $0x1e0] sm:$0xff]
      %v131 = vld [vmem:[#allocation4 + $0x1e8] sm:$0xff]
      %v132 = vld [vmem:[#allocation4 + $0x1f0] sm:$0xff]
      %v133 = vld [vmem:[#allocation4 + $0x1f8] sm:$0xff]
      %v134 = vld [vmem:[%s4] sm:$0xff]
      %v135 = vld [vmem:[%s4 + $0x8] sm:$0xff]
      %v138 = vlaneseq
      %v139 = vshrl.u32 %v138, 7
      %v140 = vsub.s32 0, %v139
      %v141 = vrot.slane %v134, %v140
      %v142 = vlaneseq
      %v143 = vshrl.u32 %v142, 7
      %v144 = vsub.s32 1, %v143
      %v145 = vrot.slane %v134, %v144
      %v146 = vlaneseq
      %v147 = vshrl.u32 %v146, 7
      %v148 = vsub.s32 2, %v147
      %v149 = vrot.slane %v134, %v148
      %v150 = vlaneseq
      %v151 = vshrl.u32 %v150, 7
      %v152 = vsub.s32 3, %v151
      %v153 = vrot.slane %v134, %v152
      %v154 = vlaneseq
      %v155 = vshrl.u32 %v154, 7
      %v156 = vsub.s32 4, %v155
      %v157 = vrot.slane %v134, %v156
      %v158 = vlaneseq
      %v159 = vshrl.u32 %v158, 7
      %v160 = vsub.s32 5, %v159
      %v161 = vrot.slane %v134, %v160
      %v162 = vlaneseq
      %v163 = vshrl.u32 %v162, 7
      %v164 = vsub.s32 6, %v163
      %v165 = vrot.slane %v134, %v164
      %v166 = vlaneseq
      %v167 = vshrl.u32 %v166, 7
      %v168 = vsub.s32 7, %v167
      %v169 = vrot.slane %v134, %v168
      %v170 = vlaneseq
      %v171 = vshrl.u32 %v170, 7
      %v172 = vsub.s32 0, %v171
      %v173 = vrot.slane %v135, %v172
      %v174 = vlaneseq
      %v175 = vshrl.u32 %v174, 7
      %v176 = vsub.s32 1, %v175
      %v177 = vrot.slane %v135, %v176
      %v178 = vlaneseq
      %v179 = vshrl.u32 %v178, 7
      %v180 = vsub.s32 2, %v179
      %v181 = vrot.slane %v135, %v180
      %v182 = vlaneseq
      %v183 = vshrl.u32 %v182, 7
      %v184 = vsub.s32 3, %v183
      %v185 = vrot.slane %v135, %v184
      %v186 = vlaneseq
      %v187 = vshrl.u32 %v186, 7
      %v188 = vsub.s32 4, %v187
      %v189 = vrot.slane %v135, %v188
      %v190 = vlaneseq
      %v191 = vshrl.u32 %v190, 7
      %v192 = vsub.s32 5, %v191
      %v193 = vrot.slane %v135, %v192
      %v194 = vlaneseq
      %v195 = vshrl.u32 %v194, 7
      %v196 = vsub.s32 6, %v195
      %v197 = vrot.slane %v135, %v196
      %v198 = vlaneseq
      %v199 = vshrl.u32 %v198, 7
      %v200 = vsub.s32 7, %v199
      %v201 = vrot.slane %v135, %v200
      %vm218 = vcmask 261120
      %v220 = vsel %vm218, %v69, 0
      %222 = vmatprep.subr.mxu0 %v71
      %223 = vmatpush1.msra.mxu0 %v70
      %224 = vmatprep.subr.mxu0 %v87
      %225 = vmatpush1.msra.mxu0 %v86
      %226 = vmatprep.subr.mxu0 %v103
      %227 = vmatpush1.msra.mxu0 %v102
      %228 = vmatprep.subr.mxu0 %v119
      %229 = vmatpush1.msra.mxu0 %v118
      %230 = vmatprep.subr.mxu0 0.0
      %231 = vmatpush1.msra.mxu0 0.0
      %232 = vmatprep.subr.mxu0 0.0
      %233 = vmatpush1.msra.mxu0 0.0
      %234 = vmatprep.subr.mxu0 0.0
      %235 = vmatpush1.msra.mxu0 0.0
      %236 = vmatprep.subr.mxu0 0.0
      %237 = vmatpush1.msra.mxu0 0.0
      %238 = vmatprep.subr.mxu0 0.0
      %239 = vmatpush1.msra.mxu0 0.0
      %240 = vmatprep.subr.mxu0 0.0
      %241 = vmatpush1.msra.mxu0 0.0
      %242 = vmatprep.subr.mxu0 0.0
      %243 = vmatpush1.msra.mxu0 0.0
      %244 = vmatprep.subr.mxu0 0.0
      %245 = vmatpush1.msra.mxu0 0.0
      %246 = vmatprep.subr.mxu0 0.0
      %247 = vmatpush1.msra.mxu0 0.0
      %248 = vmatprep.subr.mxu0 0.0
      %249 = vmatpush1.msra.mxu0 0.0
      %250 = vmatprep.subr.mxu0 0.0
      %251 = vmatpush1.msra.mxu0 0.0
      %252 = vmatprep.subr.mxu0 0.0
      %253 = vmatpush1.msra.mxu0 0.0
      %254 = vmatprep.subr.mxu0 0.0
      %255 = vmatpush1.msra.mxu0 0.0
      %256 = vmatprep.subr.mxu0 0.0
      %257 = vmatpush1.msra.mxu0 0.0
      %258 = vmatprep.subr.mxu0 0.0
      %259 = vmatpush1.msra.mxu0 0.0
      %260 = vmatprep.subr.mxu0 0.0
      %261 = vmatpush1.msra.mxu0 0.0
      %262 = vmatprep.subr.mxu0 0.0
      %263 = vmatpush1.msra.mxu0 0.0
      %264 = vmatprep.subr.mxu0 0.0
      %265 = vmatpush1.msra.mxu0 0.0
      %266 = vmatprep.subr.mxu0 0.0
      %267 = vmatpush1.msra.mxu0 0.0
      %268 = vmatprep.subr.mxu0 0.0
      %269 = vmatpush1.msra.mxu0 0.0
      %270 = vmatprep.subr.mxu0 0.0
      %271 = vmatpush1.msra.mxu0 0.0
      %272 = vmatprep.subr.mxu0 0.0
      %273 = vmatpush1.msra.mxu0 0.0
      %274 = vmatprep.subr.mxu0 0.0
      %275 = vmatpush1.msra.mxu0 0.0
      %276 = vmatprep.subr.mxu0 0.0
      %277 = vmatpush1.msra.mxu0 0.0
      %278 = vmatprep.subr.mxu0 0.0
      %279 = vmatpush1.msra.mxu0 0.0
      %280 = vmatprep.subr.mxu0 0.0
      %281 = vmatpush1.msra.mxu0 0.0
      %282 = vmatprep.subr.mxu0 0.0
      %283 = vmatpush1.msra.mxu0 0.0
      %284 = vmatprep.subr.mxu0 0.0
      %285 = vmatpush1.msra.mxu0 0.0
      %286 = vmatprep.mubr.f32.mxu0 0.0
      %287 = vmatmul.mubr.f32.gmra.mrb[0].mxu0 %v220
      %v288 = vpop.f32.mrb[0].mxu0
      %v289 = vadd.f32 %v141, %v288
      %v290 = vpop.f32.mrb[0].mxu0
      %v291 = vadd.f32 %v145, %v290
      %292 = vdwg.mxu0
      %293 = vmatprep.subr.mxu0 %v73
      %294 = vmatpush1.msra.mxu0 %v72
      %295 = vmatprep.subr.mxu0 %v89
      %296 = vmatpush1.msra.mxu0 %v88
      %297 = vmatprep.subr.mxu0 %v105
      %298 = vmatpush1.msra.mxu0 %v104
      %299 = vmatprep.subr.mxu0 %v121
      %300 = vmatpush1.msra.mxu0 %v120
      %301 = vmatprep.subr.mxu0 0.0
      %302 = vmatpush1.msra.mxu0 0.0
      %303 = vmatprep.subr.mxu0 0.0
      %304 = vmatpush1.msra.mxu0 0.0
      %305 = vmatprep.subr.mxu0 0.0
      %306 = vmatpush1.msra.mxu0 0.0
      %307 = vmatprep.subr.mxu0 0.0
      %308 = vmatpush1.msra.mxu0 0.0
      %309 = vmatprep.subr.mxu0 0.0
      %310 = vmatpush1.msra.mxu0 0.0
      %311 = vmatprep.subr.mxu0 0.0
      %312 = vmatpush1.msra.mxu0 0.0
      %313 = vmatprep.subr.mxu0 0.0
      %314 = vmatpush1.msra.mxu0 0.0
      %315 = vmatprep.subr.mxu0 0.0
      %316 = vmatpush1.msra.mxu0 0.0
      %317 = vmatprep.subr.mxu0 0.0
      %318 = vmatpush1.msra.mxu0 0.0
      %319 = vmatprep.subr.mxu0 0.0
      %320 = vmatpush1.msra.mxu0 0.0
      %321 = vmatprep.subr.mxu0 0.0
      %322 = vmatpush1.msra.mxu0 0.0
      %323 = vmatprep.subr.mxu0 0.0
      %324 = vmatpush1.msra.mxu0 0.0
      %325 = vmatprep.subr.mxu0 0.0
      %326 = vmatpush1.msra.mxu0 0.0
      %327 = vmatprep.subr.mxu0 0.0
      %328 = vmatpush1.msra.mxu0 0.0
      %329 = vmatprep.subr.mxu0 0.0
      %330 = vmatpush1.msra.mxu0 0.0
      %331 = vmatprep.subr.mxu0 0.0
      %332 = vmatpush1.msra.mxu0 0.0
      %333 = vmatprep.subr.mxu0 0.0
      %334 = vmatpush1.msra.mxu0 0.0
      %335 = vmatprep.subr.mxu0 0.0
      %336 = vmatpush1.msra.mxu0 0.0
      %337 = vmatprep.subr.mxu0 0.0
      %338 = vmatpush1.msra.mxu0 0.0
      %339 = vmatprep.subr.mxu0 0.0
      %340 = vmatpush1.msra.mxu0 0.0
      %341 = vmatprep.subr.mxu0 0.0
      %342 = vmatpush1.msra.mxu0 0.0
      %343 = vmatprep.subr.mxu0 0.0
      %344 = vmatpush1.msra.mxu0 0.0
      %345 = vmatprep.subr.mxu0 0.0
      %346 = vmatpush1.msra.mxu0 0.0
      %347 = vmatprep.subr.mxu0 0.0
      %348 = vmatpush1.msra.mxu0 0.0
      %349 = vmatprep.subr.mxu0 0.0
      %350 = vmatpush1.msra.mxu0 0.0
      %351 = vmatprep.subr.mxu0 0.0
      %352 = vmatpush1.msra.mxu0 0.0
      %353 = vmatprep.subr.mxu0 0.0
      %354 = vmatpush1.msra.mxu0 0.0
      %355 = vmatprep.subr.mxu0 0.0
      %356 = vmatpush1.msra.mxu0 0.0
      %357 = vmatprep.mubr.f32.mxu0 0.0
      %358 = vmatmul.mubr.f32.gmra.mrb[0].mxu0 %v220
      %v359 = vpop.f32.mrb[0].mxu0
      %v360 = vadd.f32 %v149, %v359
      %v361 = vpop.f32.mrb[0].mxu0
      %v362 = vadd.f32 %v153, %v361
      %363 = vdwg.mxu0
      %364 = vmatprep.subr.mxu0 %v75
      %365 = vmatpush1.msra.mxu0 %v74
      %366 = vmatprep.subr.mxu0 %v91
      %367 = vmatpush1.msra.mxu0 %v90
      %368 = vmatprep.subr.mxu0 %v107
      %369 = vmatpush1.msra.mxu0 %v106
      %370 = vmatprep.subr.mxu0 %v123
      %371 = vmatpush1.msra.mxu0 %v122
      %372 = vmatprep.subr.mxu0 0.0
      %373 = vmatpush1.msra.mxu0 0.0
      %374 = vmatprep.subr.mxu0 0.0
      %375 = vmatpush1.msra.mxu0 0.0
      %376 = vmatprep.subr.mxu0 0.0
      %377 = vmatpush1.msra.mxu0 0.0
      %378 = vmatprep.subr.mxu0 0.0
      %379 = vmatpush1.msra.mxu0 0.0
      %380 = vmatprep.subr.mxu0 0.0
      %381 = vmatpush1.msra.mxu0 0.0
      %382 = vmatprep.subr.mxu0 0.0
      %383 = vmatpush1.msra.mxu0 0.0
      %384 = vmatprep.subr.mxu0 0.0
      %385 = vmatpush1.msra.mxu0 0.0
      %386 = vmatprep.subr.mxu0 0.0
      %387 = vmatpush1.msra.mxu0 0.0
      %388 = vmatprep.subr.mxu0 0.0
      %389 = vmatpush1.msra.mxu0 0.0
      %390 = vmatprep.subr.mxu0 0.0
      %391 = vmatpush1.msra.mxu0 0.0
      %392 = vmatprep.subr.mxu0 0.0
      %393 = vmatpush1.msra.mxu0 0.0
      %394 = vmatprep.subr.mxu0 0.0
      %395 = vmatpush1.msra.mxu0 0.0
      %396 = vmatprep.subr.mxu0 0.0
      %397 = vmatpush1.msra.mxu0 0.0
      %398 = vmatprep.subr.mxu0 0.0
      %399 = vmatpush1.msra.mxu0 0.0
      %400 = vmatprep.subr.mxu0 0.0
      %401 = vmatpush1.msra.mxu0 0.0
      %402 = vmatprep.subr.mxu0 0.0
      %403 = vmatpush1.msra.mxu0 0.0
      %404 = vmatprep.subr.mxu0 0.0
      %405 = vmatpush1.msra.mxu0 0.0
      %406 = vmatprep.subr.mxu0 0.0
      %407 = vmatpush1.msra.mxu0 0.0
      %408 = vmatprep.subr.mxu0 0.0
      %409 = vmatpush1.msra.mxu0 0.0
      %410 = vmatprep.subr.mxu0 0.0
      %411 = vmatpush1.msra.mxu0 0.0
      %412 = vmatprep.subr.mxu0 0.0
      %413 = vmatpush1.msra.mxu0 0.0
      %414 = vmatprep.subr.mxu0 0.0
      %415 = vmatpush1.msra.mxu0 0.0
      %416 = vmatprep.subr.mxu0 0.0
      %417 = vmatpush1.msra.mxu0 0.0
      %418 = vmatprep.subr.mxu0 0.0
      %419 = vmatpush1.msra.mxu0 0.0
      %420 = vmatprep.subr.mxu0 0.0
      %421 = vmatpush1.msra.mxu0 0.0
      %422 = vmatprep.subr.mxu0 0.0
      %423 = vmatpush1.msra.mxu0 0.0
      %424 = vmatprep.subr.mxu0 0.0
      %425 = vmatpush1.msra.mxu0 0.0
      %426 = vmatprep.subr.mxu0 0.0
      %427 = vmatpush1.msra.mxu0 0.0
      %428 = vmatprep.mubr.f32.mxu0 0.0
      %429 = vmatmul.mubr.f32.gmra.mrb[0].mxu0 %v220
      %v430 = vpop.f32.mrb[0].mxu0
      %v431 = vadd.f32 %v157, %v430
      %v432 = vpop.f32.mrb[0].mxu0
      %v433 = vadd.f32 %v161, %v432
      %434 = vdwg.mxu0
      %435 = vmatprep.subr.mxu0 %v77
      %436 = vmatpush1.msra.mxu0 %v76
      %437 = vmatprep.subr.mxu0 %v93
      %438 = vmatpush1.msra.mxu0 %v92
      %439 = vmatprep.subr.mxu0 %v109
      %440 = vmatpush1.msra.mxu0 %v108
      %441 = vmatprep.subr.mxu0 %v125
      %442 = vmatpush1.msra.mxu0 %v124
      %443 = vmatprep.subr.mxu0 0.0
      %444 = vmatpush1.msra.mxu0 0.0
      %445 = vmatprep.subr.mxu0 0.0
      %446 = vmatpush1.msra.mxu0 0.0
      %447 = vmatprep.subr.mxu0 0.0
      %448 = vmatpush1.msra.mxu0 0.0
      %449 = vmatprep.subr.mxu0 0.0
      %450 = vmatpush1.msra.mxu0 0.0
      %451 = vmatprep.subr.mxu0 0.0
      %452 = vmatpush1.msra.mxu0 0.0
      %453 = vmatprep.subr.mxu0 0.0
      %454 = vmatpush1.msra.mxu0 0.0
      %455 = vmatprep.subr.mxu0 0.0
      %456 = vmatpush1.msra.mxu0 0.0
      %457 = vmatprep.subr.mxu0 0.0
      %458 = vmatpush1.msra.mxu0 0.0
      %459 = vmatprep.subr.mxu0 0.0
      %460 = vmatpush1.msra.mxu0 0.0
      %461 = vmatprep.subr.mxu0 0.0
      %462 = vmatpush1.msra.mxu0 0.0
      %463 = vmatprep.subr.mxu0 0.0
      %464 = vmatpush1.msra.mxu0 0.0
      %465 = vmatprep.subr.mxu0 0.0
      %466 = vmatpush1.msra.mxu0 0.0
      %467 = vmatprep.subr.mxu0 0.0
      %468 = vmatpush1.msra.mxu0 0.0
      %469 = vmatprep.subr.mxu0 0.0
      %470 = vmatpush1.msra.mxu0 0.0
      %471 = vmatprep.subr.mxu0 0.0
      %472 = vmatpush1.msra.mxu0 0.0
      %473 = vmatprep.subr.mxu0 0.0
      %474 = vmatpush1.msra.mxu0 0.0
      %475 = vmatprep.subr.mxu0 0.0
      %476 = vmatpush1.msra.mxu0 0.0
      %477 = vmatprep.subr.mxu0 0.0
      %478 = vmatpush1.msra.mxu0 0.0
      %479 = vmatprep.subr.mxu0 0.0
      %480 = vmatpush1.msra.mxu0 0.0
      %481 = vmatprep.subr.mxu0 0.0
      %482 = vmatpush1.msra.mxu0 0.0
      %483 = vmatprep.subr.mxu0 0.0
      %484 = vmatpush1.msra.mxu0 0.0
      %485 = vmatprep.subr.mxu0 0.0
      %486 = vmatpush1.msra.mxu0 0.0
      %487 = vmatprep.subr.mxu0 0.0
      %488 = vmatpush1.msra.mxu0 0.0
      %489 = vmatprep.subr.mxu0 0.0
      %490 = vmatpush1.msra.mxu0 0.0
      %491 = vmatprep.subr.mxu0 0.0
      %492 = vmatpush1.msra.mxu0 0.0
      %493 = vmatprep.subr.mxu0 0.0
      %494 = vmatpush1.msra.mxu0 0.0
      %495 = vmatprep.subr.mxu0 0.0
      %496 = vmatpush1.msra.mxu0 0.0
      %497 = vmatprep.subr.mxu0 0.0
      %498 = vmatpush1.msra.mxu0 0.0
      %499 = vmatprep.mubr.f32.mxu0 0.0
      %500 = vmatmul.mubr.f32.gmra.mrb[0].mxu0 %v220
      %v501 = vpop.f32.mrb[0].mxu0
      %v502 = vadd.f32 %v165, %v501
      %v503 = vpop.f32.mrb[0].mxu0
      %v504 = vadd.f32 %v169, %v503
      %505 = vdwg.mxu0
      %506 = vmatprep.subr.mxu0 %v79
      %507 = vmatpush1.msra.mxu0 %v78
      %508 = vmatprep.subr.mxu0 %v95
      %509 = vmatpush1.msra.mxu0 %v94
      %510 = vmatprep.subr.mxu0 %v111
      %511 = vmatpush1.msra.mxu0 %v110
      %512 = vmatprep.subr.mxu0 %v127
      %513 = vmatpush1.msra.mxu0 %v126
      %514 = vmatprep.subr.mxu0 0.0
      %515 = vmatpush1.msra.mxu0 0.0
      %516 = vmatprep.subr.mxu0 0.0
      %517 = vmatpush1.msra.mxu0 0.0
      %518 = vmatprep.subr.mxu0 0.0
      %519 = vmatpush1.msra.mxu0 0.0
      %520 = vmatprep.subr.mxu0 0.0
      %521 = vmatpush1.msra.mxu0 0.0
      %522 = vmatprep.subr.mxu0 0.0
      %523 = vmatpush1.msra.mxu0 0.0
      %524 = vmatprep.subr.mxu0 0.0
      %525 = vmatpush1.msra.mxu0 0.0
      %526 = vmatprep.subr.mxu0 0.0
      %527 = vmatpush1.msra.mxu0 0.0
      %528 = vmatprep.subr.mxu0 0.0
      %529 = vmatpush1.msra.mxu0 0.0
      %530 = vmatprep.subr.mxu0 0.0
      %531 = vmatpush1.msra.mxu0 0.0
      %532 = vmatprep.subr.mxu0 0.0
      %533 = vmatpush1.msra.mxu0 0.0
      %534 = vmatprep.subr.mxu0 0.0
      %535 = vmatpush1.msra.mxu0 0.0
      %536 = vmatprep.subr.mxu0 0.0
      %537 = vmatpush1.msra.mxu0 0.0
      %538 = vmatprep.subr.mxu0 0.0
      %539 = vmatpush1.msra.mxu0 0.0
      %540 = vmatprep.subr.mxu0 0.0
      %541 = vmatpush1.msra.mxu0 0.0
      %542 = vmatprep.subr.mxu0 0.0
      %543 = vmatpush1.msra.mxu0 0.0
      %544 = vmatprep.subr.mxu0 0.0
      %545 = vmatpush1.msra.mxu0 0.0
      %546 = vmatprep.subr.mxu0 0.0
      %547 = vmatpush1.msra.mxu0 0.0
      %548 = vmatprep.subr.mxu0 0.0
      %549 = vmatpush1.msra.mxu0 0.0
      %550 = vmatprep.subr.mxu0 0.0
      %551 = vmatpush1.msra.mxu0 0.0
      %552 = vmatprep.subr.mxu0 0.0
      %553 = vmatpush1.msra.mxu0 0.0
      %554 = vmatprep.subr.mxu0 0.0
      %555 = vmatpush1.msra.mxu0 0.0
      %556 = vmatprep.subr.mxu0 0.0
      %557 = vmatpush1.msra.mxu0 0.0
      %558 = vmatprep.subr.mxu0 0.0
      %559 = vmatpush1.msra.mxu0 0.0
      %560 = vmatprep.subr.mxu0 0.0
      %561 = vmatpush1.msra.mxu0 0.0
      %562 = vmatprep.subr.mxu0 0.0
      %563 = vmatpush1.msra.mxu0 0.0
      %564 = vmatprep.subr.mxu0 0.0
      %565 = vmatpush1.msra.mxu0 0.0
      %566 = vmatprep.subr.mxu0 0.0
      %567 = vmatpush1.msra.mxu0 0.0
      %568 = vmatprep.subr.mxu0 0.0
      %569 = vmatpush1.msra.mxu0 0.0
      %570 = vmatprep.mubr.f32.mxu0 0.0
      %571 = vmatmul.mubr.f32.gmra.mrb[0].mxu0 %v220
      %v572 = vpop.f32.mrb[0].mxu0
      %v573 = vadd.f32 %v173, %v572
      %v574 = vpop.f32.mrb[0].mxu0
      %v575 = vadd.f32 %v177, %v574
      %576 = vdwg.mxu0
      %577 = vmatprep.subr.mxu0 %v81
      %578 = vmatpush1.msra.mxu0 %v80
      %579 = vmatprep.subr.mxu0 %v97
      %580 = vmatpush1.msra.mxu0 %v96
      %581 = vmatprep.subr.mxu0 %v113
      %582 = vmatpush1.msra.mxu0 %v112
      %583 = vmatprep.subr.mxu0 %v129
      %584 = vmatpush1.msra.mxu0 %v128
      %585 = vmatprep.subr.mxu0 0.0
      %586 = vmatpush1.msra.mxu0 0.0
      %587 = vmatprep.subr.mxu0 0.0
      %588 = vmatpush1.msra.mxu0 0.0
      %589 = vmatprep.subr.mxu0 0.0
      %590 = vmatpush1.msra.mxu0 0.0
      %591 = vmatprep.subr.mxu0 0.0
      %592 = vmatpush1.msra.mxu0 0.0
      %593 = vmatprep.subr.mxu0 0.0
      %594 = vmatpush1.msra.mxu0 0.0
      %595 = vmatprep.subr.mxu0 0.0
      %596 = vmatpush1.msra.mxu0 0.0
      %597 = vmatprep.subr.mxu0 0.0
      %598 = vmatpush1.msra.mxu0 0.0
      %599 = vmatprep.subr.mxu0 0.0
      %600 = vmatpush1.msra.mxu0 0.0
      %601 = vmatprep.subr.mxu0 0.0
      %602 = vmatpush1.msra.mxu0 0.0
      %603 = vmatprep.subr.mxu0 0.0
      %604 = vmatpush1.msra.mxu0 0.0
      %605 = vmatprep.subr.mxu0 0.0
      %606 = vmatpush1.msra.mxu0 0.0
      %607 = vmatprep.subr.mxu0 0.0
      %608 = vmatpush1.msra.mxu0 0.0
      %609 = vmatprep.subr.mxu0 0.0
      %610 = vmatpush1.msra.mxu0 0.0
      %611 = vmatprep.subr.mxu0 0.0
      %612 = vmatpush1.msra.mxu0 0.0
      %613 = vmatprep.subr.mxu0 0.0
      %614 = vmatpush1.msra.mxu0 0.0
      %615 = vmatprep.subr.mxu0 0.0
      %616 = vmatpush1.msra.mxu0 0.0
      %617 = vmatprep.subr.mxu0 0.0
      %618 = vmatpush1.msra.mxu0 0.0
      %619 = vmatprep.subr.mxu0 0.0
      %620 = vmatpush1.msra.mxu0 0.0
      %621 = vmatprep.subr.mxu0 0.0
      %622 = vmatpush1.msra.mxu0 0.0
      %623 = vmatprep.subr.mxu0 0.0
      %624 = vmatpush1.msra.mxu0 0.0
      %625 = vmatprep.subr.mxu0 0.0
      %626 = vmatpush1.msra.mxu0 0.0
      %627 = vmatprep.subr.mxu0 0.0
      %628 = vmatpush1.msra.mxu0 0.0
      %629 = vmatprep.subr.mxu0 0.0
      %630 = vmatpush1.msra.mxu0 0.0
      %631 = vmatprep.subr.mxu0 0.0
      %632 = vmatpush1.msra.mxu0 0.0
      %633 = vmatprep.subr.mxu0 0.0
      %634 = vmatpush1.msra.mxu0 0.0
      %635 = vmatprep.subr.mxu0 0.0
      %636 = vmatpush1.msra.mxu0 0.0
      %637 = vmatprep.subr.mxu0 0.0
      %638 = vmatpush1.msra.mxu0 0.0
      %639 = vmatprep.subr.mxu0 0.0
      %640 = vmatpush1.msra.mxu0 0.0
      %641 = vmatprep.mubr.f32.mxu0 0.0
      %642 = vmatmul.mubr.f32.gmra.mrb[0].mxu0 %v220
      %v643 = vpop.f32.mrb[0].mxu0
      %v644 = vadd.f32 %v181, %v643
      %v645 = vpop.f32.mrb[0].mxu0
      %v646 = vadd.f32 %v185, %v645
      %647 = vdwg.mxu0
      %648 = vmatprep.subr.mxu0 %v83
      %649 = vmatpush1.msra.mxu0 %v82
      %650 = vmatprep.subr.mxu0 %v99
      %651 = vmatpush1.msra.mxu0 %v98
      %652 = vmatprep.subr.mxu0 %v115
      %653 = vmatpush1.msra.mxu0 %v114
      %654 = vmatprep.subr.mxu0 %v131
      %655 = vmatpush1.msra.mxu0 %v130
      %656 = vmatprep.subr.mxu0 0.0
      %657 = vmatpush1.msra.mxu0 0.0
      %658 = vmatprep.subr.mxu0 0.0
      %659 = vmatpush1.msra.mxu0 0.0
      %660 = vmatprep.subr.mxu0 0.0
      %661 = vmatpush1.msra.mxu0 0.0
      %662 = vmatprep.subr.mxu0 0.0
      %663 = vmatpush1.msra.mxu0 0.0
      %664 = vmatprep.subr.mxu0 0.0
      %665 = vmatpush1.msra.mxu0 0.0
      %666 = vmatprep.subr.mxu0 0.0
      %667 = vmatpush1.msra.mxu0 0.0
      %668 = vmatprep.subr.mxu0 0.0
      %669 = vmatpush1.msra.mxu0 0.0
      %670 = vmatprep.subr.mxu0 0.0
      %671 = vmatpush1.msra.mxu0 0.0
      %672 = vmatprep.subr.mxu0 0.0
      %673 = vmatpush1.msra.mxu0 0.0
      %674 = vmatprep.subr.mxu0 0.0
      %675 = vmatpush1.msra.mxu0 0.0
      %676 = vmatprep.subr.mxu0 0.0
      %677 = vmatpush1.msra.mxu0 0.0
      %678 = vmatprep.subr.mxu0 0.0
      %679 = vmatpush1.msra.mxu0 0.0
      %680 = vmatprep.subr.mxu0 0.0
      %681 = vmatpush1.msra.mxu0 0.0
      %682 = vmatprep.subr.mxu0 0.0
      %683 = vmatpush1.msra.mxu0 0.0
      %684 = vmatprep.subr.mxu0 0.0
      %685 = vmatpush1.msra.mxu0 0.0
      %686 = vmatprep.subr.mxu0 0.0
      %687 = vmatpush1.msra.mxu0 0.0
      %688 = vmatprep.subr.mxu0 0.0
      %689 = vmatpush1.msra.mxu0 0.0
      %690 = vmatprep.subr.mxu0 0.0
      %691 = vmatpush1.msra.mxu0 0.0
      %692 = vmatprep.subr.mxu0 0.0
      %693 = vmatpush1.msra.mxu0 0.0
      %694 = vmatprep.subr.mxu0 0.0
      %695 = vmatpush1.msra.mxu0 0.0
      %696 = vmatprep.subr.mxu0 0.0
      %697 = vmatpush1.msra.mxu0 0.0
      %698 = vmatprep.subr.mxu0 0.0
      %699 = vmatpush1.msra.mxu0 0.0
      %700 = vmatprep.subr.mxu0 0.0
      %701 = vmatpush1.msra.mxu0 0.0
      %702 = vmatprep.subr.mxu0 0.0
      %703 = vmatpush1.msra.mxu0 0.0
      %704 = vmatprep.subr.mxu0 0.0
      %705 = vmatpush1.msra.mxu0 0.0
      %706 = vmatprep.subr.mxu0 0.0
      %707 = vmatpush1.msra.mxu0 0.0
      %708 = vmatprep.subr.mxu0 0.0
      %709 = vmatpush1.msra.mxu0 0.0
      %710 = vmatprep.subr.mxu0 0.0
      %711 = vmatpush1.msra.mxu0 0.0
      %712 = vmatprep.mubr.f32.mxu0 0.0
      %713 = vmatmul.mubr.f32.gmra.mrb[0].mxu0 %v220
      %v714 = vpop.f32.mrb[0].mxu0
      %v715 = vadd.f32 %v189, %v714
      %v716 = vpop.f32.mrb[0].mxu0
      %v717 = vadd.f32 %v193, %v716
      %718 = vdwg.mxu0
      %719 = vmatprep.subr.mxu0 %v85
      %720 = vmatpush1.msra.mxu0 %v84
      %721 = vmatprep.subr.mxu0 %v101
      %722 = vmatpush1.msra.mxu0 %v100
      %723 = vmatprep.subr.mxu0 %v117
      %724 = vmatpush1.msra.mxu0 %v116
      %725 = vmatprep.subr.mxu0 %v133
      %726 = vmatpush1.msra.mxu0 %v132
      %727 = vmatprep.subr.mxu0 0.0
      %728 = vmatpush1.msra.mxu0 0.0
      %729 = vmatprep.subr.mxu0 0.0
      %730 = vmatpush1.msra.mxu0 0.0
      %731 = vmatprep.subr.mxu0 0.0
      %732 = vmatpush1.msra.mxu0 0.0
      %733 = vmatprep.subr.mxu0 0.0
      %734 = vmatpush1.msra.mxu0 0.0
      %735 = vmatprep.subr.mxu0 0.0
      %736 = vmatpush1.msra.mxu0 0.0
      %737 = vmatprep.subr.mxu0 0.0
      %738 = vmatpush1.msra.mxu0 0.0
      %739 = vmatprep.subr.mxu0 0.0
      %740 = vmatpush1.msra.mxu0 0.0
      %741 = vmatprep.subr.mxu0 0.0
      %742 = vmatpush1.msra.mxu0 0.0
      %743 = vmatprep.subr.mxu0 0.0
      %744 = vmatpush1.msra.mxu0 0.0
      %745 = vmatprep.subr.mxu0 0.0
      %746 = vmatpush1.msra.mxu0 0.0
      %747 = vmatprep.subr.mxu0 0.0
      %748 = vmatpush1.msra.mxu0 0.0
      %749 = vmatprep.subr.mxu0 0.0
      %750 = vmatpush1.msra.mxu0 0.0
      %751 = vmatprep.subr.mxu0 0.0
      %752 = vmatpush1.msra.mxu0 0.0
      %753 = vmatprep.subr.mxu0 0.0
      %754 = vmatpush1.msra.mxu0 0.0
      %755 = vmatprep.subr.mxu0 0.0
      %756 = vmatpush1.msra.mxu0 0.0
      %757 = vmatprep.subr.mxu0 0.0
      %758 = vmatpush1.msra.mxu0 0.0
      %759 = vmatprep.subr.mxu0 0.0
      %760 = vmatpush1.msra.mxu0 0.0
      %761 = vmatprep.subr.mxu0 0.0
      %762 = vmatpush1.msra.mxu0 0.0
      %763 = vmatprep.subr.mxu0 0.0
      %764 = vmatpush1.msra.mxu0 0.0
      %765 = vmatprep.subr.mxu0 0.0
      %766 = vmatpush1.msra.mxu0 0.0
      %767 = vmatprep.subr.mxu0 0.0
      %768 = vmatpush1.msra.mxu0 0.0
      %769 = vmatprep.subr.mxu0 0.0
      %770 = vmatpush1.msra.mxu0 0.0
      %771 = vmatprep.subr.mxu0 0.0
      %772 = vmatpush1.msra.mxu0 0.0
      %773 = vmatprep.subr.mxu0 0.0
      %774 = vmatpush1.msra.mxu0 0.0
      %775 = vmatprep.subr.mxu0 0.0
      %776 = vmatpush1.msra.mxu0 0.0
      %777 = vmatprep.subr.mxu0 0.0
      %778 = vmatpush1.msra.mxu0 0.0
      %779 = vmatprep.subr.mxu0 0.0
      %780 = vmatpush1.msra.mxu0 0.0
      %781 = vmatprep.subr.mxu0 0.0
      %782 = vmatpush1.msra.mxu0 0.0
      %783 = vmatprep.mubr.f32.mxu0 0.0
      %784 = vmatmul.mubr.f32.gmra.mrb[0].mxu0 %v220
      %v785 = vpop.f32.mrb[0].mxu0
      %v786 = vadd.f32 %v197, %v785
      %v787 = vpop.f32.mrb[0].mxu0
      %v788 = vadd.f32 %v201, %v787
      %789 = vdwg.mxu0
      %791 = vst [vmem:[#allocation2] ss:$16 sm:$0x1] %v289
      %792 = vst [vmem:[#allocation2] ss:$16 sm:$0x0] %v289
      %793 = vst [vmem:[#allocation2] ss:$16 sm:$0x0] %v289
      %794 = vst [vmem:[#allocation2] ss:$16 sm:$0x0] %v289
      %s796 = scalar_lea.vmem [#allocation2], 1
      %797 = vst [vmem:[%s796] ss:$16 sm:$0x1] %v291
      %798 = vst [vmem:[%s796] ss:$16 sm:$0x0] %v291
      %799 = vst [vmem:[%s796] ss:$16 sm:$0x0] %v291
      %800 = vst [vmem:[%s796] ss:$16 sm:$0x0] %v291
      %s802 = scalar_lea.vmem [#allocation2], 2
      %803 = vst [vmem:[%s802] ss:$16 sm:$0x1] %v360
      %804 = vst [vmem:[%s802] ss:$16 sm:$0x0] %v360
      %805 = vst [vmem:[%s802] ss:$16 sm:$0x0] %v360
      %806 = vst [vmem:[%s802] ss:$16 sm:$0x0] %v360
      %s808 = scalar_lea.vmem [#allocation2], 3
      %809 = vst [vmem:[%s808] ss:$16 sm:$0x1] %v362
      %810 = vst [vmem:[%s808] ss:$16 sm:$0x0] %v362
      %811 = vst [vmem:[%s808] ss:$16 sm:$0x0] %v362
      %812 = vst [vmem:[%s808] ss:$16 sm:$0x0] %v362
      %s814 = scalar_lea.vmem [#allocation2], 4
      %815 = vst [vmem:[%s814] ss:$16 sm:$0x1] %v431
      %816 = vst [vmem:[%s814] ss:$16 sm:$0x0] %v431
      %817 = vst [vmem:[%s814] ss:$16 sm:$0x0] %v431
      %818 = vst [vmem:[%s814] ss:$16 sm:$0x0] %v431
      %s820 = scalar_lea.vmem [#allocation2], 5
      %821 = vst [vmem:[%s820] ss:$16 sm:$0x1] %v433
      %822 = vst [vmem:[%s820] ss:$16 sm:$0x0] %v433
      %823 = vst [vmem:[%s820] ss:$16 sm:$0x0] %v433
      %824 = vst [vmem:[%s820] ss:$16 sm:$0x0] %v433
      %s826 = scalar_lea.vmem [#allocation2], 6
      %827 = vst [vmem:[%s826] ss:$16 sm:$0x1] %v502
      %828 = vst [vmem:[%s826] ss:$16 sm:$0x0] %v502
      %829 = vst [vmem:[%s826] ss:$16 sm:$0x0] %v502
      %830 = vst [vmem:[%s826] ss:$16 sm:$0x0] %v502
      %s832 = scalar_lea.vmem [#allocation2], 7
      %833 = vst [vmem:[%s832] ss:$16 sm:$0x1] %v504
      %834 = vst [vmem:[%s832] ss:$16 sm:$0x0] %v504
      %835 = vst [vmem:[%s832] ss:$16 sm:$0x0] %v504
      %836 = vst [vmem:[%s832] ss:$16 sm:$0x0] %v504
      %s838 = scalar_lea.vmem [#allocation2], 8
      %839 = vst [vmem:[%s838] ss:$16 sm:$0x1] %v573
      %840 = vst [vmem:[%s838] ss:$16 sm:$0x0] %v573
      %841 = vst [vmem:[%s838] ss:$16 sm:$0x0] %v573
      %842 = vst [vmem:[%s838] ss:$16 sm:$0x0] %v573
      %s844 = scalar_lea.vmem [#allocation2], 9
      %845 = vst [vmem:[%s844] ss:$16 sm:$0x1] %v575
      %846 = vst [vmem:[%s844] ss:$16 sm:$0x0] %v575
      %847 = vst [vmem:[%s844] ss:$16 sm:$0x0] %v575
      %848 = vst [vmem:[%s844] ss:$16 sm:$0x0] %v575
      %s850 = scalar_lea.vmem [#allocation2], 10
      %851 = vst [vmem:[%s850] ss:$16 sm:$0x1] %v644
      %852 = vst [vmem:[%s850] ss:$16 sm:$0x0] %v644
      %853 = vst [vmem:[%s850] ss:$16 sm:$0x0] %v644
      %854 = vst [vmem:[%s850] ss:$16 sm:$0x0] %v644
      %s856 = scalar_lea.vmem [#allocation2], 11
      %857 = vst [vmem:[%s856] ss:$16 sm:$0x1] %v646
      %858 = vst [vmem:[%s856] ss:$16 sm:$0x0] %v646
      %859 = vst [vmem:[%s856] ss:$16 sm:$0x0] %v646
      %860 = vst [vmem:[%s856] ss:$16 sm:$0x0] %v646
      %s862 = scalar_lea.vmem [#allocation2], 12
      %863 = vst [vmem:[%s862] ss:$16 sm:$0x1] %v715
      %864 = vst [vmem:[%s862] ss:$16 sm:$0x0] %v715
      %865 = vst [vmem:[%s862] ss:$16 sm:$0x0] %v715
      %866 = vst [vmem:[%s862] ss:$16 sm:$0x0] %v715
      %s868 = scalar_lea.vmem [#allocation2], 13
      %869 = vst [vmem:[%s868] ss:$16 sm:$0x1] %v717
      %870 = vst [vmem:[%s868] ss:$16 sm:$0x0] %v717
      %871 = vst [vmem:[%s868] ss:$16 sm:$0x0] %v717
      %872 = vst [vmem:[%s868] ss:$16 sm:$0x0] %v717
      %s874 = scalar_lea.vmem [#allocation2], 14
      %875 = vst [vmem:[%s874] ss:$16 sm:$0x1] %v786
      %876 = vst [vmem:[%s874] ss:$16 sm:$0x0] %v786
      %877 = vst [vmem:[%s874] ss:$16 sm:$0x0] %v786
      %878 = vst [vmem:[%s874] ss:$16 sm:$0x0] %v786
      %s880 = scalar_lea.vmem [#allocation2], 15
      %881 = vst [vmem:[%s880] ss:$16 sm:$0x1] %v788
      %882 = vst [vmem:[%s880] ss:$16 sm:$0x0] %v788
      %883 = vst [vmem:[%s880] ss:$16 sm:$0x0] %v788
      %884 = vst [vmem:[%s880] ss:$16 sm:$0x0] %v788
      %v885 = vld [vmem:[%s2] sm:$0x1]
      %v886 = vld [vmem:[%s5] sm:$0xff]
      %v887 = vld [vmem:[%s5 + $0x8] sm:$0xff]
      %v888 = vld [vmem:[%s5 + $0x10] sm:$0xff]
      %v889 = vld [vmem:[%s5 + $0x18] sm:$0xff]
      %v890 = vld [vmem:[%s6] sm:$0x1]
      %v892 = vsel %vm218, %v885, 0
      %894 = vmatprep.subr.mxu0 0.0
      %895 = vmatpush1.msra.mxu0 %v886
      %896 = vmatprep.subr.mxu0 0.0
      %897 = vmatpush1.msra.mxu0 %v887
      %898 = vmatprep.subr.mxu0 0.0
      %899 = vmatpush1.msra.mxu0 %v888
      %900 = vmatprep.subr.mxu0 0.0
      %901 = vmatpush1.msra.mxu0 %v889
      %902 = vmatprep.subr.mxu0 0.0
      %903 = vmatpush1.msra.mxu0 0.0
      %904 = vmatprep.subr.mxu0 0.0
      %905 = vmatpush1.msra.mxu0 0.0
      %906 = vmatprep.subr.mxu0 0.0
      %907 = vmatpush1.msra.mxu0 0.0
      %908 = vmatprep.subr.mxu0 0.0
      %909 = vmatpush1.msra.mxu0 0.0
      %910 = vmatprep.subr.mxu0 0.0
      %911 = vmatpush1.msra.mxu0 0.0
      %912 = vmatprep.subr.mxu0 0.0
      %913 = vmatpush1.msra.mxu0 0.0
      %914 = vmatprep.subr.mxu0 0.0
      %915 = vmatpush1.msra.mxu0 0.0
      %916 = vmatprep.subr.mxu0 0.0
      %917 = vmatpush1.msra.mxu0 0.0
      %918 = vmatprep.subr.mxu0 0.0
      %919 = vmatpush1.msra.mxu0 0.0
      %920 = vmatprep.subr.mxu0 0.0
      %921 = vmatpush1.msra.mxu0 0.0
      %922 = vmatprep.subr.mxu0 0.0
      %923 = vmatpush1.msra.mxu0 0.0
      %924 = vmatprep.subr.mxu0 0.0
      %925 = vmatpush1.msra.mxu0 0.0
      %926 = vmatprep.subr.mxu0 0.0
      %927 = vmatpush1.msra.mxu0 0.0
      %928 = vmatprep.subr.mxu0 0.0
      %929 = vmatpush1.msra.mxu0 0.0
      %930 = vmatprep.subr.mxu0 0.0
      %931 = vmatpush1.msra.mxu0 0.0
      %932 = vmatprep.subr.mxu0 0.0
      %933 = vmatpush1.msra.mxu0 0.0
      %934 = vmatprep.subr.mxu0 0.0
      %935 = vmatpush1.msra.mxu0 0.0
      %936 = vmatprep.subr.mxu0 0.0
      %937 = vmatpush1.msra.mxu0 0.0
      %938 = vmatprep.subr.mxu0 0.0
      %939 = vmatpush1.msra.mxu0 0.0
      %940 = vmatprep.subr.mxu0 0.0
      %941 = vmatpush1.msra.mxu0 0.0
      %942 = vmatprep.subr.mxu0 0.0
      %943 = vmatpush1.msra.mxu0 0.0
      %944 = vmatprep.subr.mxu0 0.0
      %945 = vmatpush1.msra.mxu0 0.0
      %946 = vmatprep.subr.mxu0 0.0
      %947 = vmatpush1.msra.mxu0 0.0
      %948 = vmatprep.subr.mxu0 0.0
      %949 = vmatpush1.msra.mxu0 0.0
      %950 = vmatprep.subr.mxu0 0.0
      %951 = vmatpush1.msra.mxu0 0.0
      %952 = vmatprep.subr.mxu0 0.0
      %953 = vmatpush1.msra.mxu0 0.0
      %954 = vmatprep.subr.mxu0 0.0
      %955 = vmatpush1.msra.mxu0 0.0
      %956 = vmatprep.subr.mxu0 0.0
      %957 = vmatpush1.msra.mxu0 0.0
      %958 = vmatprep.mubr.f32.mxu0 0.0
      %959 = vmatmul.mubr.f32.gmra.mrb[0].mxu0 %v892
      %v960 = vpop.f32.mrb[0].mxu0
      %v961 = vadd.f32 %v890, %v960
      %v962 = vpop.f32.mrb[0].mxu0
      %963 = vdwg.mxu0
      %964 = vst [vmem:[#allocation3] sm:$0x1] %v961
    $region37: #{tpu_custom_call.1} parent=1 // pred_fallthru
      _
    %v965 = vld [vmem:[#allocation2] sm:$0xff]
    %v966 = vld [vmem:[#allocation2 + $0x8] sm:$0xff]
    %v967 = vld [vmem:[%s60] sm:$0xff]
    %v968 = vld [vmem:[%s60 + $0x8] sm:$0xff]
    %v969 = vld [vmem:[%s60 + $0x10] sm:$0xff]
    %v970 = vld [vmem:[%s60 + $0x18] sm:$0xff]
    %v971 = vld [vmem:[%s60 + $0x20] sm:$0xff]
    %v972 = vld [vmem:[%s60 + $0x28] sm:$0xff]
    %v973 = vld [vmem:[%s60 + $0x30] sm:$0xff]
    %v974 = vld [vmem:[%s60 + $0x38] sm:$0xff]
    %v975 = vld [vmem:[%s60 + $0x40] sm:$0xff]
    %v976 = vld [vmem:[%s60 + $0x48] sm:$0xff]
    %v977 = vld [vmem:[%s60 + $0x50] sm:$0xff]
    %v978 = vld [vmem:[%s60 + $0x58] sm:$0xff]
    %v979 = vld [vmem:[%s60 + $0x60] sm:$0xff]
    %v980 = vld [vmem:[%s60 + $0x68] sm:$0xff]
    %v981 = vld [vmem:[%s60 + $0x70] sm:$0xff]
    %v982 = vld [vmem:[%s60 + $0x78] sm:$0xff]
    %v983 = vld [vmem:[#allocation3] sm:$0x1]
    %v985 = vlaneseq
    %v986 = vshrl.u32 %v985, 7
    %v987 = vsub.s32 0, %v986
    %v988 = vrot.slane %v983, %v987
    %vm990 = vcmask 130048
    %v992 = vsel %vm990, %v967, 0
    %v995 = vsel %vm990, %v968, 0
    %v998 = vsel %vm990, %v969, 0
    %v1001 = vsel %vm990, %v970, 0
    %v1004 = vsel %vm990, %v971, 0
    %v1007 = vsel %vm990, %v972, 0
    %v1010 = vsel %vm990, %v973, 0
    %v1013 = vsel %vm990, %v974, 0
    %v1016 = vsel %vm990, %v975, 0
    %v1019 = vsel %vm990, %v976, 0
    %v1022 = vsel %vm990, %v977, 0
    %v1025 = vsel %vm990, %v978, 0
    %v1028 = vsel %vm990, %v979, 0
    %v1031 = vsel %vm990, %v980, 0
    %v1034 = vsel %vm990, %v981, 0
    %v1037 = vsel %vm990, %v982, 0
    %1039 = vmatprep.subr.mxu0 0.0
    %1040 = vmatpush1.msra.mxu0 %v965
    %1041 = vmatprep.subr.mxu0 0.0
    %1042 = vmatpush1.msra.mxu0 %v966
    %1043 = vmatprep.subr.mxu0 0.0
    %1044 = vmatpush1.msra.mxu0 0.0
    %1045 = vmatprep.subr.mxu0 0.0
    %1046 = vmatpush1.msra.mxu0 0.0
    %1047 = vmatprep.subr.mxu0 0.0
    %1048 = vmatpush1.msra.mxu0 0.0
    %1049 = vmatprep.subr.mxu0 0.0
    %1050 = vmatpush1.msra.mxu0 0.0
    %1051 = vmatprep.subr.mxu0 0.0
    %1052 = vmatpush1.msra.mxu0 0.0
    %1053 = vmatprep.subr.mxu0 0.0
    %1054 = vmatpush1.msra.mxu0 0.0
    %1055 = vmatprep.subr.mxu0 0.0
    %1056 = vmatpush1.msra.mxu0 0.0
    %1057 = vmatprep.subr.mxu0 0.0
    %1058 = vmatpush1.msra.mxu0 0.0
    %1059 = vmatprep.subr.mxu0 0.0
    %1060 = vmatpush1.msra.mxu0 0.0
    %1061 = vmatprep.subr.mxu0 0.0
    %1062 = vmatpush1.msra.mxu0 0.0
    %1063 = vmatprep.subr.mxu0 0.0
    %1064 = vmatpush1.msra.mxu0 0.0
    %1065 = vmatprep.subr.mxu0 0.0
    %1066 = vmatpush1.msra.mxu0 0.0
    %1067 = vmatprep.subr.mxu0 0.0
    %1068 = vmatpush1.msra.mxu0 0.0
    %1069 = vmatprep.subr.mxu0 0.0
    %1070 = vmatpush1.msra.mxu0 0.0
    %1071 = vmatprep.subr.mxu0 0.0
    %1072 = vmatpush1.msra.mxu0 0.0
    %1073 = vmatprep.subr.mxu0 0.0
    %1074 = vmatpush1.msra.mxu0 0.0
    %1075 = vmatprep.subr.mxu0 0.0
    %1076 = vmatpush1.msra.mxu0 0.0
    %1077 = vmatprep.subr.mxu0 0.0
    %1078 = vmatpush1.msra.mxu0 0.0
    %1079 = vmatprep.subr.mxu0 0.0
    %1080 = vmatpush1.msra.mxu0 0.0
    %1081 = vmatprep.subr.mxu0 0.0
    %1082 = vmatpush1.msra.mxu0 0.0
    %1083 = vmatprep.subr.mxu0 0.0
    %1084 = vmatpush1.msra.mxu0 0.0
    %1085 = vmatprep.subr.mxu0 0.0
    %1086 = vmatpush1.msra.mxu0 0.0
    %1087 = vmatprep.subr.mxu0 0.0
    %1088 = vmatpush1.msra.mxu0 0.0
    %1089 = vmatprep.subr.mxu0 0.0
    %1090 = vmatpush1.msra.mxu0 0.0
    %1091 = vmatprep.subr.mxu0 0.0
    %1092 = vmatpush1.msra.mxu0 0.0
    %1093 = vmatprep.subr.mxu0 0.0
    %1094 = vmatpush1.msra.mxu0 0.0
    %1095 = vmatprep.subr.mxu0 0.0
    %1096 = vmatpush1.msra.mxu0 0.0
    %1097 = vmatprep.subr.mxu0 0.0
    %1098 = vmatpush1.msra.mxu0 0.0
    %1099 = vmatprep.subr.mxu0 0.0
    %1100 = vmatpush1.msra.mxu0 0.0
    %1101 = vmatprep.subr.mxu0 0.0
    %1102 = vmatpush1.msra.mxu0 0.0
    %1103 = vmatprep.mubr.f32.mxu0 0.0
    %1104 = vmatmul.mubr.f32.gmra.mrb[0].mxu0 %v992
    %v1105 = vpop.f32.mrb[0].mxu0
    %v1106 = vadd.f32 %v988, %v1105
    %v1107 = vpop.f32.mrb[0].mxu0
    %1108 = vmatprep.mubr.f32.mxu0 0.0
    %1109 = vmatmul.mubr.f32.gmra.mrb[0].mxu0 %v995
    %v1110 = vpop.f32.mrb[0].mxu0
    %v1111 = vadd.f32 %v988, %v1110
    %v1112 = vpop.f32.mrb[0].mxu0
    %1113 = vmatprep.mubr.f32.mxu0 0.0
    %1114 = vmatmul.mubr.f32.gmra.mrb[0].mxu0 %v998
    %v1115 = vpop.f32.mrb[0].mxu0
    %v1116 = vadd.f32 %v988, %v1115
    %v1117 = vpop.f32.mrb[0].mxu0
    %1118 = vmatprep.mubr.f32.mxu0 0.0
    %1119 = vmatmul.mubr.f32.gmra.mrb[0].mxu0 %v1001
    %v1120 = vpop.f32.mrb[0].mxu0
    %v1121 = vadd.f32 %v988, %v1120
    %v1122 = vpop.f32.mrb[0].mxu0
    %1123 = vmatprep.mubr.f32.mxu0 0.0
    %1124 = vmatmul.mubr.f32.gmra.mrb[0].mxu0 %v1004
    %v1125 = vpop.f32.mrb[0].mxu0
    %v1126 = vadd.f32 %v988, %v1125
    %v1127 = vpop.f32.mrb[0].mxu0
    %1128 = vmatprep.mubr.f32.mxu0 0.0
    %1129 = vmatmul.mubr.f32.gmra.mrb[0].mxu0 %v1007
    %v1130 = vpop.f32.mrb[0].mxu0
    %v1131 = vadd.f32 %v988, %v1130
    %v1132 = vpop.f32.mrb[0].mxu0
    %1133 = vmatprep.mubr.f32.mxu0 0.0
    %1134 = vmatmul.mubr.f32.gmra.mrb[0].mxu0 %v1010
    %v1135 = vpop.f32.mrb[0].mxu0
    %v1136 = vadd.f32 %v988, %v1135
    %v1137 = vpop.f32.mrb[0].mxu0
    %1138 = vmatprep.mubr.f32.mxu0 0.0
    %1139 = vmatmul.mubr.f32.gmra.mrb[0].mxu0 %v1013
    %v1140 = vpop.f32.mrb[0].mxu0
    %v1141 = vadd.f32 %v988, %v1140
    %v1142 = vpop.f32.mrb[0].mxu0
    %1143 = vmatprep.mubr.f32.mxu0 0.0
    %1144 = vmatmul.mubr.f32.gmra.mrb[0].mxu0 %v1016
    %v1145 = vpop.f32.mrb[0].mxu0
    %v1146 = vadd.f32 %v988, %v1145
    %v1147 = vpop.f32.mrb[0].mxu0
    %1148 = vmatprep.mubr.f32.mxu0 0.0
    %1149 = vmatmul.mubr.f32.gmra.mrb[0].mxu0 %v1019
    %v1150 = vpop.f32.mrb[0].mxu0
    %v1151 = vadd.f32 %v988, %v1150
    %v1152 = vpop.f32.mrb[0].mxu0
    %1153 = vmatprep.mubr.f32.mxu0 0.0
    %1154 = vmatmul.mubr.f32.gmra.mrb[0].mxu0 %v1022
    %v1155 = vpop.f32.mrb[0].mxu0
    %v1156 = vadd.f32 %v988, %v1155
    %v1157 = vpop.f32.mrb[0].mxu0
    %1158 = vmatprep.mubr.f32.mxu0 0.0
    %1159 = vmatmul.mubr.f32.gmra.mrb[0].mxu0 %v1025
    %v1160 = vpop.f32.mrb[0].mxu0
    %v1161 = vadd.f32 %v988, %v1160
    %v1162 = vpop.f32.mrb[0].mxu0
    %1163 = vmatprep.mubr.f32.mxu0 0.0
    %1164 = vmatmul.mubr.f32.gmra.mrb[0].mxu0 %v1028
    %v1165 = vpop.f32.mrb[0].mxu0
    %v1166 = vadd.f32 %v988, %v1165
    %v1167 = vpop.f32.mrb[0].mxu0
    %1168 = vmatprep.mubr.f32.mxu0 0.0
    %1169 = vmatmul.mubr.f32.gmra.mrb[0].mxu0 %v1031
    %v1170 = vpop.f32.mrb[0].mxu0
    %v1171 = vadd.f32 %v988, %v1170
    %v1172 = vpop.f32.mrb[0].mxu0
    %1173 = vmatprep.mubr.f32.mxu0 0.0
    %1174 = vmatmul.mubr.f32.gmra.mrb[0].mxu0 %v1034
    %v1175 = vpop.f32.mrb[0].mxu0
    %v1176 = vadd.f32 %v988, %v1175
    %v1177 = vpop.f32.mrb[0].mxu0
    %1178 = vmatprep.mubr.f32.mxu0 0.0
    %1179 = vmatmul.mubr.f32.gmra.mrb[0].mxu0 %v1037
    %v1180 = vpop.f32.mrb[0].mxu0
    %v1181 = vadd.f32 %v988, %v1180
    %v1182 = vpop.f32.mrb[0].mxu0
    %1183 = vdwg.mxu0
    %1184 = vst [vmem:[#allocation7] sm:$0xff] %v1106
    %1185 = vst [vmem:[#allocation7 + $0x8] sm:$0xff] %v1111
    %1186 = vst [vmem:[#allocation7 + $0x10] sm:$0xff] %v1116
    %1187 = vst [vmem:[#allocation7 + $0x18] sm:$0xff] %v1121
    %1188 = vst [vmem:[#allocation7 + $0x20] sm:$0xff] %v1126
    %1189 = vst [vmem:[#allocation7 + $0x28] sm:$0xff] %v1131
    %1190 = vst [vmem:[#allocation7 + $0x30] sm:$0xff] %v1136
    %1191 = vst [vmem:[#allocation7 + $0x38] sm:$0xff] %v1141
    %1192 = vst [vmem:[#allocation7 + $0x40] sm:$0xff] %v1146
    %1193 = vst [vmem:[#allocation7 + $0x48] sm:$0xff] %v1151
    %1194 = vst [vmem:[#allocation7 + $0x50] sm:$0xff] %v1156
    %1195 = vst [vmem:[#allocation7 + $0x58] sm:$0xff] %v1161
    %1196 = vst [vmem:[#allocation7 + $0x60] sm:$0xff] %v1166
    %1197 = vst [vmem:[#allocation7 + $0x68] sm:$0xff] %v1171
    %1198 = vst [vmem:[#allocation7 + $0x70] sm:$0xff] %v1176
    %1199 = vst [vmem:[#allocation7 + $0x78] sm:$0xff] %v1181
    // Predicated region
    $region38: #{tpu_custom_call.1} parent=1 // pred_check
      _
    $region39: #{tpu_custom_call.1} parent=1 // pred_check_branch
      %1201 = sbr.rel (0) target = $region41
    $region40: #{tpu_custom_call.1} parent=1 // pred_region
      %s1202 = sadd.s32 0, 0
      %s1203 = smul.u32 16, %s1202
      %s1205 = ssub.s32 2048, 2048
      %1206 = vsyncadd [#allocation6], %s1205
      %s1207 = smul.addr %s1203, 128
      %s1208 = scalar_lea.hbm %s7, %s1207
      %s1209 = sshll.u32 [#allocation7], 4
      %s1210 = int_to_ptr.vmem [resolvable:$true] %s1209
      %1215 = dma.vmem_to_hbm [thread:$0]  %s1210, 2048, %s1208, [#allocation6], 128, 128, 8
    $region41: #{tpu_custom_call.1} parent=1 // pred_fallthru
      _
    // Predicated region
    $region42: #{tpu_custom_call.1} parent=1 // pred_check
      _
    $region43: #{tpu_custom_call.1} parent=1 // pred_check_branch
      %1217 = sbr.rel (0) target = $region45
    $region44: #{tpu_custom_call.1} parent=1 // pred_region
      %1218 = dma.done [#allocation6], 2048
    $region45: #{tpu_custom_call.1} parent=1 // pred_fallthru
      _
    %1219 = vsyncpa [#allocation5], 1
    %1220 = vsyncpa [#allocation6], 1

</llo_original>
